<compile_context>
chip_gen: v7x
topology: tpu7x:2x2x1
jax: 0.10.0
libtpu: 0.0.40
codegen_flags: <defaults>
</compile_context>

<pallas_src>
import functools

import jax
import jax.numpy as jnp
from jax import lax
from jax.experimental import pallas as pl
from jax.experimental.pallas import tpu as pltpu


def _dropout(out, seed_ref, dropout_p):
    """Inverted dropout on the output tile (train path only)."""
    if dropout_p >= 1.0:
        return jnp.zeros_like(out)
    pltpu.prng_seed(seed_ref[0], pl.program_id(0))
    bits = pltpu.bitcast(pltpu.prng_random_bits(out.shape), jnp.uint32)
    thresh = jnp.uint32(min(int(dropout_p * float(1 << 32)), (1 << 32) - 1))
    keep = bits >= thresh
    return jnp.where(keep, out * (1.0 / (1.0 - dropout_p)), jnp.zeros_like(out))


def _softmax_last(s):
    """Numerically stable softmax over the last dim. Exact divide: the
    normalization tensor is tiny and fully hidden under matmul/DMA slack."""
    s = s - jnp.max(s, axis=-1, keepdims=True)
    p = jnp.exp(s)
    return p / jnp.sum(p, axis=-1, keepdims=True)


def _collapsed_kernel(*refs, scale, dropout_p, train, bt, sq, sk):
    """One grid step == Bt batches collapsed into single 2-D MXU matmuls.

    q_ref: (Bt*Sq, D)   k_ref: (Bt*Sk, D)
    w_ref: (Bt*Sk, V)   (w^T row-tiled Bt times)   b_ref: (1, V)
    o_ref: (Bt*Sq, V)
    """
    if train and dropout_p > 0.0:
        seed_ref, q_ref, k_ref, w_ref, b_ref, o_ref = refs
    else:
        seed_ref = None
        q_ref, k_ref, w_ref, b_ref, o_ref = refs

    # One MXU push for the whole tile: contract on D with rhs "transposed"
    # in the dot dims (no in-kernel data transpose).
    s = lax.dot_general(
        q_ref[...], k_ref[...],
        dimension_numbers=(((1,), (1,)), ((), ())),
        preferred_element_type=jnp.float32,
    )                                                    # (Bt*Sq, Bt*Sk)
    if scale != 1.0:
        s = s * scale

    if bt > 1:
        # Mask cross-batch (off block-diagonal) scores before softmax so each
        # query row normalizes only over its own batch's keys.
        row_b = lax.broadcasted_iota(jnp.int32, s.shape, 0) // sq
        col_b = lax.broadcasted_iota(jnp.int32, s.shape, 1) // sk
        s = jnp.where(row_b == col_b, s, jnp.float32(-1e30))

    p = _softmax_last(s)

    # Projection: the masked (zero) prob columns line up with the repeated
    # weight copies, so one (Bt*Sq, Bt*Sk) @ (Bt*Sk, V) matmul equals the
    # per-batch (Sq, Sk) @ (Sk, V) projections.
    out = jnp.dot(p, w_ref[...], preferred_element_type=jnp.float32) + b_ref[...]

    if train and dropout_p > 0.0:
        out = _dropout(out, seed_ref, dropout_p)

    # NOTE: v_size < 128 -> masked stores; negligible at these sizes. For
    # larger narrow outputs, present a lane-dense output slab instead.
    o_ref[...] = out.astype(o_ref.dtype)


def _batched_kernel(*refs, scale, dropout_p, train):
    """Fallback for tiles too wide to collapse (Bt*Sk > 128).

    q_ref: (Bt, Sq, D)  k_ref: (Bt, Sk, D)  w_ref: (Sk, V)  b_ref: (1, V)
    o_ref: (Bt*Sq, V)
    """
    if train and dropout_p > 0.0:
        seed_ref, q_ref, k_ref, w_ref, b_ref, o_ref = refs
    else:
        seed_ref = None
        q_ref, k_ref, w_ref, b_ref, o_ref = refs

    s = lax.dot_general(
        q_ref[...], k_ref[...],
        dimension_numbers=(((2,), (2,)), ((0,), (0,))),
        preferred_element_type=jnp.float32,
    )                                                    # (Bt, Sq, Sk)
    if scale != 1.0:
        s = s * scale
    p = _softmax_last(s)

    bt, sq, sk = p.shape
    out = jnp.dot(p.reshape(bt * sq, sk), w_ref[...],
                  preferred_element_type=jnp.float32) + b_ref[...]

    if train and dropout_p > 0.0:
        out = _dropout(out, seed_ref, dropout_p)

    o_ref[...] = out.astype(o_ref.dtype)


def _pick_batch_tile(B, Sq, Sk, D, v_size):
    """Largest divisor of B that (a) leaves >= 2 parallel tiles when B >= 2 so
    both v7x TensorCores get work, (b) keeps blocked dims 8-aligned, and
    (c) keeps the double-buffered per-tile resident set under ~12 MiB (safe
    for v5e's 16 MiB default scoped VMEM / v7x's 64 MiB physical VMEM)."""
    budget = 12 * 1024 * 1024

    def tile_bytes(bt):
        sk_eff = bt * Sk if bt * Sk <= 128 else Sk       # collapsed vs batched
        q_b = bt * Sq * D
        k_b = bt * Sk * D
        o_b = bt * Sq * v_size
        w_b = max(sk_eff, Sk) * v_size
        s_b = bt * Sq * sk_eff                           # scores/probs temps
        # x2 on pipelined q/k/out blocks, x2 headroom on the score temps.
        return 4 * (2 * (q_b + k_b + o_b) + w_b + 2 * s_b)

    divisors = [d for d in range(1, B + 1) if B % d == 0]
    cap = B if B == 1 else max(d for d in divisors if d <= B // 2)

    def ok(bt):
        if tile_bytes(bt) > budget:
            return False
        if bt == B:                       # full-array blocks: always layout-ok
            return True
        return (bt * Sq) % 8 == 0 and (bt * Sk) % 8 == 0

    cands = [d for d in divisors if d <= cap and ok(d)]
    return max(cands) if cands else B


def attention_proj(query, key, w, bias, inv_scale_factor, *,
                   dropout_p=0.5, train=False, seed=0, batch_tile=None):
    B, Sq, D = query.shape
    Bk, Sk, Dk = key.shape
    assert Bk == B and Dk == D, "query/key batch and feature dims must match"
    v_size, qk_size = w.shape
    assert qk_size == Sk, "Linear in_features must equal key sequence length"

    # inv_scale_factor must be a static Python scalar (baked into the kernel).
    scale = 1.0 / float(inv_scale_factor)
    use_dropout = bool(train) and float(dropout_p) > 0.0

    if batch_tile is None:
        batch_tile = _pick_batch_tile(B, Sq, Sk, D, v_size)
    else:
        assert 1 <= batch_tile <= B and B % batch_tile == 0, \
            "batch_tile must be a positive divisor of the batch size"
    Bt = int(batch_tile)
    num_tiles = B // Bt
    collapsed = Bt * Sk <= 128

    w_t = jnp.transpose(w)                 # (Sk, V): transposed once, outside
    bias2d = bias.reshape(1, v_size)

    if collapsed:
        q_in = query.reshape(B * Sq, D)    # pure reshapes (no copies)
        k_in = key.reshape(B * Sk, D)
        w_in = jnp.tile(w_t, (Bt, 1))      # (Bt*Sk, V) row-tiled weight
        kernel = functools.partial(
            _collapsed_kernel, scale=scale, dropout_p=float(dropout_p),
            train=bool(train), bt=Bt, sq=Sq, sk=Sk)
        in_specs = [
            pl.BlockSpec((Bt * Sq, D), lambda i, *_: (i, 0)),
            pl.BlockSpec((Bt * Sk, D), lambda i, *_: (i, 0)),
            pl.BlockSpec((Bt * Sk, v_size), lambda i, *_: (0, 0)),
            pl.BlockSpec((1, v_size), lambda i, *_: (0, 0)),
        ]
    else:
        q_in, k_in, w_in = query, key, w_t
        kernel = functools.partial(
            _batched_kernel, scale=scale, dropout_p=float(dropout_p),
            train=bool(train))
        in_specs = [
            pl.BlockSpec((Bt, Sq, D), lambda i, *_: (i, 0, 0)),
            pl.BlockSpec((Bt, Sk, D), lambda i, *_: (i, 0, 0)),
            pl.BlockSpec((Sk, v_size), lambda i, *_: (0, 0)),
            pl.BlockSpec((1, v_size), lambda i, *_: (0, 0)),
        ]
    out_spec = pl.BlockSpec((Bt * Sq, v_size), lambda i, *_: (i, 0))

    operands = [q_in, k_in, w_in, bias2d]
    num_prefetch = 0
    if use_dropout:
        # Seed only exists (and is DMA'd to SMEM) on the training path.
        operands.insert(0, jnp.asarray([seed], dtype=jnp.int32))
        num_prefetch = 1

    out_flat = pl.pallas_call(
        kernel,
        out_shape=jax.ShapeDtypeStruct((B * Sq, v_size), query.dtype),
        grid_spec=pltpu.PrefetchScalarGridSpec(
            num_scalar_prefetch=num_prefetch,
            grid=(num_tiles,),
            in_specs=in_specs,
            out_specs=out_spec,
        ),
        compiler_params=pltpu.CompilerParams(
            dimension_semantics=("parallel",)),   # batch tiles are independent
    )(*operands)

    return out_flat.reshape(B, Sq, v_size)


if __name__ == "__main__":
    # Small, consistent shapes implied by the forward pass:
    #   query (B, Sq, D), key (B, Sk, D), Linear(in=Sk, out=v_size)
    B, Sq, Sk, D = 2, 8, 8, 32
    qk_size, v_size = Sk, 8
    inv_scale_factor = 1.0

    key0 = jax.random.PRNGKey(0)
    kq, kk, kw, kb = jax.random.split(key0, 4)

    query = jax.random.normal(kq, (B, Sq, D), dtype=jnp.float32)
    key_t = jax.random.normal(kk, (B, Sk, D), dtype=jnp.float32)

    # Deterministic PyTorch-style Linear init: uniform(-1/sqrt(in), 1/sqrt(in)).
    bound = 1.0 / (qk_size ** 0.5)
    w = jax.random.uniform(kw, (v_size, qk_size), jnp.float32, -bound, bound)
    b = jax.random.uniform(kb, (v_size,), jnp.float32, -bound, bound)

    # TODO(synk): the original forward references an undefined global
    # `dropout_p`; we keep the module default p=0.5 and run in eval mode
    # (train=False), so dropout is the identity (model.eval() semantics).
    out = attention_proj(query, key_t, w, b, inv_scale_factor,
                         dropout_p=0.5, train=False)
    out = jax.block_until_ready(out)

    # Pure-JAX reference (highest-precision matmuls).
    scores = jnp.einsum("bqd,bkd->bqk", query, key_t,
                        precision=lax.Precision.HIGHEST) / inv_scale_factor
    probs = jax.nn.softmax(scores, axis=-1)
    ref = jnp.einsum("bqk,vk->bqv", probs, w,
                     precision=lax.Precision.HIGHEST) + b

    assert out.shape == (B, Sq, v_size)
    assert jnp.allclose(out, ref, atol=1e-4, rtol=1e-4), \
        float(jnp.max(jnp.abs(out - ref)))

    print("KERNEL_OK")
</pallas_src>

<mosaic_0001>
module attributes {stable_mosaic.version = 11 : i64} {
  func.func @_collapsed_kernel(%arg0: i32, %arg1: memref<8x32xf32, #tpu.memory_space<vmem>>, %arg2: memref<8x32xf32, #tpu.memory_space<vmem>>, %arg3: memref<8x8xf32, #tpu.memory_space<vmem>>, %arg4: memref<1x8xf32, #tpu.memory_space<vmem>>, %arg5: memref<8x8xf32, #tpu.memory_space<vmem>>) attributes {dimension_semantics = [#tpu.dimension_semantics<parallel>], iteration_bounds = array<i64: 2>, scalar_prefetch = 0 : i64, scratch_operands = 0 : i64, tpu.core_type = #tpu.core_type<tc>, window_params = [{transform_indices = @transform_0, window_bounds = array<i64: 8, 32>}, {transform_indices = @transform_1, window_bounds = array<i64: 8, 32>}, {pipeline_mode = #tpu.pipeline_mode<synchronous>, transform_indices = @transform_2, window_bounds = array<i64: 8, 8>}, {pipeline_mode = #tpu.pipeline_mode<synchronous>, transform_indices = @transform_3, window_bounds = array<i64: 1, 8>}, {transform_indices = @transform_4, window_bounds = array<i64: 8, 8>}]} {
    %c0 = arith.constant 0 : index
    %c0_0 = arith.constant 0 : index
    %0 = vector.load %arg1[%c0, %c0_0] : memref<8x32xf32, #tpu.memory_space<vmem>>, vector<8x32xf32>
    %c0_1 = arith.constant 0 : index
    %c0_2 = arith.constant 0 : index
    %1 = vector.load %arg2[%c0_1, %c0_2] : memref<8x32xf32, #tpu.memory_space<vmem>>, vector<8x32xf32>
    %cst = arith.constant dense<0.000000e+00> : vector<8x8xf32>
    %2 = tpu.matmul %0, %1, %cst {dimension_numbers = #tpu.dot_dimension_numbers<[1], [1], [0], [0], [0, 0, 1, 0], [], []>} : vector<8x32xf32>, vector<8x32xf32>, vector<8x8xf32> -> vector<8x8xf32>
    %cst_3 = arith.constant dense<0xFF800000> : vector<8xf32>
    %3 = vector.multi_reduction <maximumf>, %2, %cst_3 [1] : vector<8x8xf32> to vector<8xf32>
    %4 = vector.shape_cast %3 : vector<8xf32> to vector<8x1xf32>
    %5 = vector.broadcast %4 : vector<8x1xf32> to vector<8x8xf32>
    %6 = arith.subf %2, %5 : vector<8x8xf32>
    %7 = math.exp %6 : vector<8x8xf32>
    %cst_4 = arith.constant dense<0.000000e+00> : vector<8xf32>
    %8 = vector.multi_reduction <add>, %7, %cst_4 [1] : vector<8x8xf32> to vector<8xf32>
    %9 = vector.shape_cast %8 : vector<8xf32> to vector<8x1xf32>
    %10 = vector.broadcast %9 : vector<8x1xf32> to vector<8x8xf32>
    %11 = arith.divf %7, %10 : vector<8x8xf32>
    %c0_5 = arith.constant 0 : index
    %c0_6 = arith.constant 0 : index
    %12 = vector.load %arg3[%c0_5, %c0_6] : memref<8x8xf32, #tpu.memory_space<vmem>>, vector<8x8xf32>
    %cst_7 = arith.constant dense<0.000000e+00> : vector<8x8xf32>
    %13 = tpu.matmul %11, %12, %cst_7 {dimension_numbers = #tpu.dot_dimension_numbers<[1], [0], [0], [1], [0, 0, 1, 1], [], []>} : vector<8x8xf32>, vector<8x8xf32>, vector<8x8xf32> -> vector<8x8xf32>
    %c0_8 = arith.constant 0 : index
    %c0_9 = arith.constant 0 : index
    %14 = vector.load %arg4[%c0_8, %c0_9] : memref<1x8xf32, #tpu.memory_space<vmem>>, vector<1x8xf32>
    %15 = vector.broadcast %14 : vector<1x8xf32> to vector<8x8xf32>
    %16 = arith.addf %13, %15 : vector<8x8xf32>
    %c0_10 = arith.constant 0 : index
    %c0_11 = arith.constant 0 : index
    %17 = vector.load %arg5[%c0_10, %c0_11] : memref<8x8xf32, #tpu.memory_space<vmem>>, vector<8x8xf32>
    tpu.vector_store %arg5[%c0_10, %c0_11], %16 {strides = array<i32>} : memref<8x8xf32, #tpu.memory_space<vmem>>, vector<8x8xf32>,
    return
  }
  func.func @transform_0(%arg0: i32) -> (i32, i32) {
    %c0_i32 = arith.constant 0 : i32
    %c0_i32_0 = arith.constant 0 : i32
    return %arg0, %c0_i32 : i32, i32
  }
  func.func @transform_1(%arg0: i32) -> (i32, i32) {
    %c0_i32 = arith.constant 0 : i32
    %c0_i32_0 = arith.constant 0 : i32
    return %arg0, %c0_i32 : i32, i32
  }
  func.func @transform_2(%arg0: i32) -> (i32, i32) {
    %c0_i32 = arith.constant 0 : i32
    %c0_i32_0 = arith.constant 0 : i32
    %c0_i32_1 = arith.constant 0 : i32
    return %c0_i32, %c0_i32_0 : i32, i32
  }
  func.func @transform_3(%arg0: i32) -> (i32, i32) {
    %c0_i32 = arith.constant 0 : i32
    %c0_i32_0 = arith.constant 0 : i32
    %c0_i32_1 = arith.constant 0 : i32
    return %c0_i32, %c0_i32_0 : i32, i32
  }
  func.func @transform_4(%arg0: i32) -> (i32, i32) {
    %c0_i32 = arith.constant 0 : i32
    %c0_i32_0 = arith.constant 0 : i32
    return %arg0, %c0_i32 : i32, i32
  }
}

</mosaic_0001>

<llo_original>
// kernel: tpu_custom_call.1
$region0: #{tpu_custom_call.1}
  #allocation0 [shape = 'u32[]', space=smem, size = 0x4, offset = 0x4, fixed_abs, tag = 'smem constant byte address 0x4 - core index']
  #allocation1 [shape = 'u32[144,128]{1,0:T(1,128)}', space=vmem, size = 0x12000, scoped, tag = 'internal scratch']
  %s0 = inlined_call_operand.hbm [shape: f32[16,32], index: 0, kind: input, shape index: {}]
  %s1 = inlined_call_operand.hbm [shape: f32[16,32], index: 1, kind: input, shape index: {}]
  %s2 = inlined_call_operand.hbm [shape: f32[8,8], index: 2, kind: input, shape index: {}]
  %s3 = inlined_call_operand.vmem [shape: f32[1,8], index: 3, kind: input, shape index: {}]
  %s4 = inlined_call_operand.vmem [shape: f32[16,8], index: 4, kind: output, shape index: {}]
  %s5 = sld [smem:[#allocation0]]
  $region61: #{tpu_custom_call.1} parent=0
    _
  %s7 = ssub.s32 1, %s5
  %s8 = scalar_select 0, %s7, %s5
  $region1: #{tpu_custom_call.1} parent=0
    #allocation2 [shape = 'u8[8192]{0}', space=vmem, size = 0x2000, scoped, tag = 'input window, operand 0']
    #allocation3 [shape = 's32[2]{0}', space=sflag, size = 0x8, scoped, tag = 'scoped memory for tpu_custom_call.1']
    #allocation4 [shape = 'u8[8192]{0}', space=vmem, size = 0x2000, scoped, tag = 'input window, operand 1']
    #allocation5 [shape = 's32[2]{0}', space=sflag, size = 0x8, scoped, tag = 'scoped memory for tpu_custom_call.1']
    #allocation6 [shape = 'u8[4096]{0}', space=vmem, size = 0x1000, scoped, tag = 'input window, operand 2, single buffered']
    %9 = vsyncpa [#allocation3], 0
    %s10 = scalar_lea.sflag [#allocation3], 1
    %11 = vsyncpa %s10, 0
    %12 = vsyncpa [#allocation5], 0
    %s13 = scalar_lea.sflag [#allocation5], 1
    %14 = vsyncpa %s13, 0
    loop: start=0, step=1, limit=4
    $region2: #{tpu_custom_call.1} parent=1 // loop_pre_header
      _
    $region3: #{tpu_custom_call.1} parent=1 // loop_header
      %s16 = sphi 0, %s20
      %p17 = scmp.ge.s32.totalorder %s16, 4
      %s26 = sphi 0, %s28
      %s29 = sphi 0, %s26
      %s30 = sphi 0, %s29
      %s46 = sphi 0, %s30
      %s52 = sphi 0, %s54
      %s55 = sphi 0, %s52
      %s56 = sphi 0, %s55
      %s72 = sphi 0, %s56
      %s76 = sphi 0, %s76
      %s78 = sphi 0, %s76
      %s79 = sphi 0, %s78
      %s93 = sphi 0, %s79
      %s97 = sphi 0, %s97
      %s99 = sphi 0, %s97
      %s100 = sphi 0, %s99
      %s114 = sphi 0, %s100
      %s120 = sphi 0, %s122
      %s123 = sphi 0, %s120
      %s124 = sphi 0, %s123
      %s140 = sphi 0, %s124
    $region4: #{tpu_custom_call.1} parent=1 // loop_header_branch
      %19 = sbr.rel (%p17) target = $region8
    $region5: #{tpu_custom_call.1} parent=1 // loop_body
      %s21 = ssub.s32 %s16, 1
      %s22 = ssub.s32 %s16, 2
      %s23 = sadd.s32 %s16, 1
      %s24 = ssub.s32 %s16, %s23
      %p25 = scmp.eq.s32.totalorder %s24, 0
      %s27 = sadd.s32 %s26, 1
      %s28 = scalar_select %p25, %s26, %s27
      %p31 = pneg %p25
      %p32 = scmp.eq.s32.totalorder %s16, 1
      %p33 = por %p31, %p32
      %p34 = scmp.ne.s32.totalorder %s26, %s29
      %p35 = scmp.eq.s32.totalorder %s16, 0
      %p36 = por %p34, %p35
      %p37 = scmp.ne.s32.totalorder %s26, %s29
      %p38 = scmp.eq.s32.totalorder %s21, 1
      %p39 = por %p37, %p38
      %p40 = scmp.ne.s32.totalorder %s29, %s30
      %p41 = scmp.eq.s32.totalorder %s21, 0
      %p42 = por %p40, %p41
      %p43 = scmp.ne.s32.totalorder %s29, %s30
      %p44 = scmp.eq.s32.totalorder %s22, 1
      %p45 = por %p43, %p44
      %p47 = scmp.ne.s32.totalorder %s30, %s46
      %p48 = scmp.eq.s32.totalorder %s22, 0
      %p49 = por %p47, %p48
      %s50 = ssub.s32 %s16, %s23
      %p51 = scmp.eq.s32.totalorder %s50, 0
      %s53 = sadd.s32 %s52, 1
      %s54 = scalar_select %p51, %s52, %s53
      %p57 = pneg %p51
      %p58 = scmp.eq.s32.totalorder %s16, 1
      %p59 = por %p57, %p58
      %p60 = scmp.ne.s32.totalorder %s52, %s55
      %p61 = scmp.eq.s32.totalorder %s16, 0
      %p62 = por %p60, %p61
      %p63 = scmp.ne.s32.totalorder %s52, %s55
      %p64 = scmp.eq.s32.totalorder %s21, 1
      %p65 = por %p63, %p64
      %p66 = scmp.ne.s32.totalorder %s55, %s56
      %p67 = scmp.eq.s32.totalorder %s21, 0
      %p68 = por %p66, %p67
      %p69 = scmp.ne.s32.totalorder %s55, %s56
      %p70 = scmp.eq.s32.totalorder %s22, 1
      %p71 = por %p69, %p70
      %p73 = scmp.ne.s32.totalorder %s56, %s72
      %p74 = scmp.eq.s32.totalorder %s22, 0
      %p75 = por %p73, %p74
      %s77 = sadd.s32 %s76, 1
      %p80 = scmp.eq.s32.totalorder %s16, 1
      %p81 = scmp.ne.s32.totalorder %s76, %s78
      %p82 = scmp.eq.s32.totalorder %s16, 0
      %p83 = por %p81, %p82
      %p84 = scmp.ne.s32.totalorder %s76, %s78
      %p85 = scmp.eq.s32.totalorder %s21, 1
      %p86 = por %p84, %p85
      %p87 = scmp.ne.s32.totalorder %s78, %s79
      %p88 = scmp.eq.s32.totalorder %s21, 0
      %p89 = por %p87, %p88
      %p90 = scmp.ne.s32.totalorder %s78, %s79
      %p91 = scmp.eq.s32.totalorder %s22, 1
      %p92 = por %p90, %p91
      %p94 = scmp.ne.s32.totalorder %s79, %s93
      %p95 = scmp.eq.s32.totalorder %s22, 0
      %p96 = por %p94, %p95
      %s98 = sadd.s32 %s97, 1
      %p101 = scmp.eq.s32.totalorder %s16, 1
      %p102 = scmp.ne.s32.totalorder %s97, %s99
      %p103 = scmp.eq.s32.totalorder %s16, 0
      %p104 = por %p102, %p103
      %p105 = scmp.ne.s32.totalorder %s97, %s99
      %p106 = scmp.eq.s32.totalorder %s21, 1
      %p107 = por %p105, %p106
      %p108 = scmp.ne.s32.totalorder %s99, %s100
      %p109 = scmp.eq.s32.totalorder %s21, 0
      %p110 = por %p108, %p109
      %p111 = scmp.ne.s32.totalorder %s99, %s100
      %p112 = scmp.eq.s32.totalorder %s22, 1
      %p113 = por %p111, %p112
      %p115 = scmp.ne.s32.totalorder %s100, %s114
      %p116 = scmp.eq.s32.totalorder %s22, 0
      %p117 = por %p115, %p116
      %s118 = ssub.s32 %s16, %s23
      %p119 = scmp.eq.s32.totalorder %s118, 0
      %s121 = sadd.s32 %s120, 1
      %s122 = scalar_select %p119, %s120, %s121
      %p125 = pneg %p119
      %p126 = scmp.eq.s32.totalorder %s16, 1
      %p127 = por %p125, %p126
      %p128 = scmp.ne.s32.totalorder %s120, %s123
      %p129 = scmp.eq.s32.totalorder %s16, 0
      %p130 = por %p128, %p129
      %p131 = scmp.ne.s32.totalorder %s120, %s123
      %p132 = scmp.eq.s32.totalorder %s21, 1
      %p133 = por %p131, %p132
      %p134 = scmp.ne.s32.totalorder %s123, %s124
      %p135 = scmp.eq.s32.totalorder %s21, 0
      %p136 = por %p134, %p135
      %p137 = scmp.ne.s32.totalorder %s123, %s124
      %p138 = scmp.eq.s32.totalorder %s22, 1
      %p139 = por %p137, %p138
      %p141 = scmp.ne.s32.totalorder %s124, %s140
      %p142 = scmp.eq.s32.totalorder %s22, 0
      %p143 = por %p141, %p142
      %p144 = scmp.le.s32.totalorder 1, %s16
      %p145 = scmp.lt.s32.totalorder %s16, 3
      %p146 = pnand %p144, %p145
      %p147 = pneg %p146
      // Predicated region
      $region9: #{tpu_custom_call.1} parent=5 // pred_check
        _
      $region10: #{tpu_custom_call.1} parent=5 // pred_check_branch
        %149 = sbr.rel (%p146) target = $region12
      $region11: #{tpu_custom_call.1} parent=5 // pred_region
        %s150 = ssub.s32 %s16, 1
        // Predicated region
        $region13: #{tpu_custom_call.1} parent=11 // pred_check
          %p151 = pneg %p89
        $region14: #{tpu_custom_call.1} parent=11 // pred_check_branch
          %153 = sbr.rel (%p151) target = $region16
        $region15: #{tpu_custom_call.1} parent=11 // pred_region
          %s155 = ssub.s32 128, 128
          %156 = vsyncadd [#allocation5], %s155
          %s158 = sshll.u32 [#allocation6], 4
          %s159 = int_to_ptr.vmem [resolvable:$true] %s158
          %161 = dma.hbm_to_vmem [thread:$0]  %s2, 128, %s159, [#allocation5]
        $region16: #{tpu_custom_call.1} parent=11 // pred_fallthru
          _
        // Predicated region
        $region17: #{tpu_custom_call.1} parent=11 // pred_check
          %p162 = pneg %p110
        $region18: #{tpu_custom_call.1} parent=11 // pred_check_branch
          %164 = sbr.rel (%p162) target = $region20
        $region19: #{tpu_custom_call.1} parent=11 // pred_region
          _
        $region20: #{tpu_custom_call.1} parent=11 // pred_fallthru
          _
      $region12: #{tpu_custom_call.1} parent=5 // pred_fallthru
        _
      %p165 = scmp.lt.s32.totalorder %s16, 2
      // Predicated region
      $region21: #{tpu_custom_call.1} parent=5 // pred_check
        %p166 = pneg %p165
      $region22: #{tpu_custom_call.1} parent=5 // pred_check_branch
        %168 = sbr.rel (%p166) target = $region24
      $region23: #{tpu_custom_call.1} parent=5 // pred_region
        // Predicated region
        $region25: #{tpu_custom_call.1} parent=23 // pred_check
          %p169 = pneg %p36
        $region26: #{tpu_custom_call.1} parent=23 // pred_check_branch
          %171 = sbr.rel (%p169) target = $region28
        $region27: #{tpu_custom_call.1} parent=23 // pred_region
          %s172 = sand.u32 %s26, 1
          %s173 = scalar_lea.sflag [#allocation3], %s172
          %s174 = sand.u32 %s26, 1
          %s175 = smul.addr %s174, 8
          %s176 = scalar_lea.vmem [#allocation2], %s175
          %s178 = ssub.s32 128, 128
          %179 = vsyncadd %s173, %s178
          %s180 = smul.addr %s16, 128
          %s181 = scalar_lea.hbm %s0, %s180
          %s183 = sshll.u32 %s176, 4
          %s184 = int_to_ptr.vmem [resolvable:$true] %s183
          %186 = dma.hbm_to_vmem [thread:$0]  %s181, 128, %s184, %s173
        $region28: #{tpu_custom_call.1} parent=23 // pred_fallthru
          _
        // Predicated region
        $region29: #{tpu_custom_call.1} parent=23 // pred_check
          %p187 = pneg %p62
        $region30: #{tpu_custom_call.1} parent=23 // pred_check_branch
          %189 = sbr.rel (%p187) target = $region32
        $region31: #{tpu_custom_call.1} parent=23 // pred_region
          %s190 = sand.u32 %s16, 1
          %s191 = scalar_lea.sflag [#allocation5], %s190
          %s192 = sand.u32 %s52, 1
          %s193 = smul.addr %s192, 8
          %s194 = scalar_lea.vmem [#allocation4], %s193
          %s196 = ssub.s32 128, 128
          %197 = vsyncadd %s191, %s196
          %s198 = smul.addr %s16, 128
          %s199 = scalar_lea.hbm %s1, %s198
          %s201 = sshll.u32 %s194, 4
          %s202 = int_to_ptr.vmem [resolvable:$true] %s201
          %204 = dma.hbm_to_vmem [thread:$0]  %s199, 128, %s202, %s191
        $region32: #{tpu_custom_call.1} parent=23 // pred_fallthru
          _
      $region24: #{tpu_custom_call.1} parent=5 // pred_fallthru
        _
      %p205 = scmp.le.s32.totalorder 1, %s16
      %p206 = scmp.lt.s32.totalorder %s16, 3
      %p207 = pnand %p205, %p206
      %p208 = pneg %p207
      // Predicated region
      $region33: #{tpu_custom_call.1} parent=5 // pred_check
        _
      $region34: #{tpu_custom_call.1} parent=5 // pred_check_branch
        %210 = sbr.rel (%p207) target = $region36
      $region35: #{tpu_custom_call.1} parent=5 // pred_region
        %s211 = ssub.s32 %s16, 1
        %s212 = sand.u32 %s29, 1
        %s213 = scalar_lea.sflag [#allocation3], %s212
        %s214 = sand.u32 %s29, 1
        %s215 = smul.addr %s214, 8
        %s216 = scalar_lea.vmem [#allocation2], %s215
        // Predicated region
        $region37: #{tpu_custom_call.1} parent=35 // pred_check
          %p217 = pneg %p42
        $region38: #{tpu_custom_call.1} parent=35 // pred_check_branch
          %219 = sbr.rel (%p217) target = $region40
        $region39: #{tpu_custom_call.1} parent=35 // pred_region
          %220 = dma.done %s213, 128
        $region40: #{tpu_custom_call.1} parent=35 // pred_fallthru
          _
        %s221 = sand.u32 %s21, 1
        %s222 = scalar_lea.sflag [#allocation5], %s221
        %s223 = sand.u32 %s55, 1
        %s224 = smul.addr %s223, 8
        %s225 = scalar_lea.vmem [#allocation4], %s224
        // Predicated region
        $region41: #{tpu_custom_call.1} parent=35 // pred_check
          %p226 = pneg %p68
        $region42: #{tpu_custom_call.1} parent=35 // pred_check_branch
          %228 = sbr.rel (%p226) target = $region44
        $region43: #{tpu_custom_call.1} parent=35 // pred_region
          %229 = dma.done %s222, 128
        $region44: #{tpu_custom_call.1} parent=35 // pred_fallthru
          _
        // Predicated region
        $region45: #{tpu_custom_call.1} parent=35 // pred_check
          %p230 = pneg %p89
        $region46: #{tpu_custom_call.1} parent=35 // pred_check_branch
          %232 = sbr.rel (%p230) target = $region48
        $region47: #{tpu_custom_call.1} parent=35 // pred_region
          %233 = dma.done [#allocation5], 128
        $region48: #{tpu_custom_call.1} parent=35 // pred_fallthru
          _
        %s234 = sand.u32 %s29, 1
        %s235 = scalar_lea.sflag [#allocation3], %s234
        %s236 = sand.u32 %s29, 1
        %s237 = smul.addr %s236, 8
        %s238 = scalar_lea.vmem [#allocation2], %s237
        %p239 = pneg %p42
        %p240 = pneg %p39
        %s241 = sand.u32 %s21, 1
        %s242 = scalar_lea.sflag [#allocation5], %s241
        %s243 = sand.u32 %s55, 1
        %s244 = smul.addr %s243, 8
        %s245 = scalar_lea.vmem [#allocation4], %s244
        %p246 = pneg %p68
        %p247 = pneg %p65
        %p248 = pneg %p89
        %p249 = pneg %p86
        %p250 = pneg %p110
        %p251 = pneg %p107
        %p252 = pneg %p136
        %p253 = pneg %p133
        %p254 = scmp.lt.s32.totalorder %s21, 1
        %s255 = scalar_select %p254, %s21, 1
        %s256 = smul.addr %s255, 8
        %s257 = scalar_lea.vmem %s4, %s256
        %p258 = scmp.lt.s32.totalorder %s21, 1
        %s259 = scalar_select %p258, %s21, 1
        %s260 = smul.addr %s259, 8
        %s261 = scalar_lea.vmem %s4, %s260
        %v262 = vld [vmem:[%s216] sm:$0xff]
        %v263 = vld [vmem:[%s225] sm:$0xff]
        %vm264 = vcmask 261120
        %v266 = vsel %vm264, %v262, 0
        %v269 = vsel %vm264, %v263, 0
        %271 = vmatprep.subr.mxu0 0.0
        %272 = vmatpush1.xpose.msra.mxu0 %v269
        %273 = vmatprep.subr.mxu0 0.0
        %274 = vmatpush1.xpose.msra.mxu0 0.0
        %275 = vmatprep.subr.mxu0 0.0
        %276 = vmatpush1.xpose.msra.mxu0 0.0
        %277 = vmatprep.subr.mxu0 0.0
        %278 = vmatpush1.xpose.msra.mxu0 0.0
        %279 = vmatprep.subr.mxu0 0.0
        %280 = vmatpush1.xpose.msra.mxu0 0.0
        %281 = vmatprep.subr.mxu0 0.0
        %282 = vmatpush1.xpose.msra.mxu0 0.0
        %283 = vmatprep.subr.mxu0 0.0
        %284 = vmatpush1.xpose.msra.mxu0 0.0
        %285 = vmatprep.subr.mxu0 0.0
        %286 = vmatpush1.xpose.msra.mxu0 0.0
        %287 = vmatprep.subr.mxu0 0.0
        %288 = vmatpush1.xpose.msra.mxu0 0.0
        %289 = vmatprep.subr.mxu0 0.0
        %290 = vmatpush1.xpose.msra.mxu0 0.0
        %291 = vmatprep.subr.mxu0 0.0
        %292 = vmatpush1.xpose.msra.mxu0 0.0
        %293 = vmatprep.subr.mxu0 0.0
        %294 = vmatpush1.xpose.msra.mxu0 0.0
        %295 = vmatprep.subr.mxu0 0.0
        %296 = vmatpush1.xpose.msra.mxu0 0.0
        %297 = vmatprep.subr.mxu0 0.0
        %298 = vmatpush1.xpose.msra.mxu0 0.0
        %299 = vmatprep.subr.mxu0 0.0
        %300 = vmatpush1.xpose.msra.mxu0 0.0
        %301 = vmatprep.subr.mxu0 0.0
        %302 = vmatpush1.xpose.msra.mxu0 0.0
        %303 = vmatprep.subr.mxu0 0.0
        %304 = vmatpush1.xpose.msra.mxu0 0.0
        %305 = vmatprep.subr.mxu0 0.0
        %306 = vmatpush1.xpose.msra.mxu0 0.0
        %307 = vmatprep.subr.mxu0 0.0
        %308 = vmatpush1.xpose.msra.mxu0 0.0
        %309 = vmatprep.subr.mxu0 0.0
        %310 = vmatpush1.xpose.msra.mxu0 0.0
        %311 = vmatprep.subr.mxu0 0.0
        %312 = vmatpush1.xpose.msra.mxu0 0.0
        %313 = vmatprep.subr.mxu0 0.0
        %314 = vmatpush1.xpose.msra.mxu0 0.0
        %315 = vmatprep.subr.mxu0 0.0
        %316 = vmatpush1.xpose.msra.mxu0 0.0
        %317 = vmatprep.subr.mxu0 0.0
        %318 = vmatpush1.xpose.msra.mxu0 0.0
        %319 = vmatprep.subr.mxu0 0.0
        %320 = vmatpush1.xpose.msra.mxu0 0.0
        %321 = vmatprep.subr.mxu0 0.0
        %322 = vmatpush1.xpose.msra.mxu0 0.0
        %323 = vmatprep.subr.mxu0 0.0
        %324 = vmatpush1.xpose.msra.mxu0 0.0
        %325 = vmatprep.subr.mxu0 0.0
        %326 = vmatpush1.xpose.msra.mxu0 0.0
        %327 = vmatprep.subr.mxu0 0.0
        %328 = vmatpush1.xpose.msra.mxu0 0.0
        %329 = vmatprep.subr.mxu0 0.0
        %330 = vmatpush1.xpose.msra.mxu0 0.0
        %331 = vmatprep.subr.mxu0 0.0
        %332 = vmatpush1.xpose.msra.mxu0 0.0
        %333 = vmatprep.subr.mxu0 0.0
        %334 = vmatpush1.xpose.msra.mxu0 0.0
        %335 = vmatprep.mubr.f32.mxu0 0.0
        %336 = vmatmul.mubr.f32.gmra.mrb[0].mxu0 %v266
        %v337 = vpop.f32.mrb[0].mxu0
        %v338 = vadd.f32 0.0, %v337
        %v339 = vpop.f32.mrb[0].mxu0
        %340 = vdwg.mxu0
        %vm341 = vcmask 64512
        %v342 = vsel %vm341, %v338, -inf
        %343 = vmax.xlane.f32.xlu0 %v342
        %v344 = vpop.xlane.xlu0 %343
        %v345 = vsub.f32 %v338, %v344
        %v346 = vmul.f32 %v345, 1.442695
        %v347 = vpow.pop %v346
        %v348 = vsel %vm341, %v347, 0.0
        %349 = vadd.xlane.f32.xlu0 %v348
        %v350 = vpop.xlane.xlu0 %349
        %v351 = vrcp.pop %v350
        %v352 = vmul.f32 %v347, %v351
        %v353 = vld [vmem:[#allocation6] sm:$0xff]
        %v354 = vld [vmem:[%s3] sm:$0x1]
        %v356 = vlaneseq
        %v357 = vshrl.u32 %v356, 7
        %v358 = vsub.s32 0, %v357
        %v359 = vrot.slane %v354, %v358
        %v362 = vsel %vm341, %v352, 0
        %364 = vmatprep.subr.mxu0 0.0
        %365 = vmatpush1.msra.mxu0 %v353
        %366 = vmatprep.subr.mxu0 0.0
        %367 = vmatpush1.msra.mxu0 0.0
        %368 = vmatprep.subr.mxu0 0.0
        %369 = vmatpush1.msra.mxu0 0.0
        %370 = vmatprep.subr.mxu0 0.0
        %371 = vmatpush1.msra.mxu0 0.0
        %372 = vmatprep.subr.mxu0 0.0
        %373 = vmatpush1.msra.mxu0 0.0
        %374 = vmatprep.subr.mxu0 0.0
        %375 = vmatpush1.msra.mxu0 0.0
        %376 = vmatprep.subr.mxu0 0.0
        %377 = vmatpush1.msra.mxu0 0.0
        %378 = vmatprep.subr.mxu0 0.0
        %379 = vmatpush1.msra.mxu0 0.0
        %380 = vmatprep.subr.mxu0 0.0
        %381 = vmatpush1.msra.mxu0 0.0
        %382 = vmatprep.subr.mxu0 0.0
        %383 = vmatpush1.msra.mxu0 0.0
        %384 = vmatprep.subr.mxu0 0.0
        %385 = vmatpush1.msra.mxu0 0.0
        %386 = vmatprep.subr.mxu0 0.0
        %387 = vmatpush1.msra.mxu0 0.0
        %388 = vmatprep.subr.mxu0 0.0
        %389 = vmatpush1.msra.mxu0 0.0
        %390 = vmatprep.subr.mxu0 0.0
        %391 = vmatpush1.msra.mxu0 0.0
        %392 = vmatprep.subr.mxu0 0.0
        %393 = vmatpush1.msra.mxu0 0.0
        %394 = vmatprep.subr.mxu0 0.0
        %395 = vmatpush1.msra.mxu0 0.0
        %396 = vmatprep.subr.mxu0 0.0
        %397 = vmatpush1.msra.mxu0 0.0
        %398 = vmatprep.subr.mxu0 0.0
        %399 = vmatpush1.msra.mxu0 0.0
        %400 = vmatprep.subr.mxu0 0.0
        %401 = vmatpush1.msra.mxu0 0.0
        %402 = vmatprep.subr.mxu0 0.0
        %403 = vmatpush1.msra.mxu0 0.0
        %404 = vmatprep.subr.mxu0 0.0
        %405 = vmatpush1.msra.mxu0 0.0
        %406 = vmatprep.subr.mxu0 0.0
        %407 = vmatpush1.msra.mxu0 0.0
        %408 = vmatprep.subr.mxu0 0.0
        %409 = vmatpush1.msra.mxu0 0.0
        %410 = vmatprep.subr.mxu0 0.0
        %411 = vmatpush1.msra.mxu0 0.0
        %412 = vmatprep.subr.mxu0 0.0
        %413 = vmatpush1.msra.mxu0 0.0
        %414 = vmatprep.subr.mxu0 0.0
        %415 = vmatpush1.msra.mxu0 0.0
        %416 = vmatprep.subr.mxu0 0.0
        %417 = vmatpush1.msra.mxu0 0.0
        %418 = vmatprep.subr.mxu0 0.0
        %419 = vmatpush1.msra.mxu0 0.0
        %420 = vmatprep.subr.mxu0 0.0
        %421 = vmatpush1.msra.mxu0 0.0
        %422 = vmatprep.subr.mxu0 0.0
        %423 = vmatpush1.msra.mxu0 0.0
        %424 = vmatprep.subr.mxu0 0.0
        %425 = vmatpush1.msra.mxu0 0.0
        %426 = vmatprep.subr.mxu0 0.0
        %427 = vmatpush1.msra.mxu0 0.0
        %428 = vmatprep.mubr.f32.mxu0 0.0
        %429 = vmatmul.mubr.f32.gmra.mrb[0].mxu0 %v362
        %v430 = vpop.f32.mrb[0].mxu0
        %v431 = vadd.f32 %v359, %v430
        %v432 = vpop.f32.mrb[0].mxu0
        %433 = vdwg.mxu0
        %434 = vst.msk [vmem:[%s261] sm:$0xff] %vm341, %v431
        %p435 = scmp.lt.s32.totalorder %s21, 1
        %s436 = scalar_select %p435, %s21, 1
        %s437 = smul.addr %s436, 8
        %s438 = scalar_lea.vmem %s4, %s437
        // Predicated region
        $region49: #{tpu_custom_call.1} parent=35 // pred_check
          %p439 = pneg %p133
        $region50: #{tpu_custom_call.1} parent=35 // pred_check_branch
          %441 = sbr.rel (%p439) target = $region52
        $region51: #{tpu_custom_call.1} parent=35 // pred_region
          _
        $region52: #{tpu_custom_call.1} parent=35 // pred_fallthru
          _
      $region36: #{tpu_custom_call.1} parent=5 // pred_fallthru
        _
      %p442 = scmp.le.s32.totalorder 2, %s16
      // Predicated region
      $region53: #{tpu_custom_call.1} parent=5 // pred_check
        %p443 = pneg %p442
      $region54: #{tpu_custom_call.1} parent=5 // pred_check_branch
        %445 = sbr.rel (%p443) target = $region56
      $region55: #{tpu_custom_call.1} parent=5 // pred_region
        %s446 = ssub.s32 %s16, 2
        // Predicated region
        $region57: #{tpu_custom_call.1} parent=55 // pred_check
          %p447 = pneg %p139
        $region58: #{tpu_custom_call.1} parent=55 // pred_check_branch
          %449 = sbr.rel (%p447) target = $region60
        $region59: #{tpu_custom_call.1} parent=55 // pred_region
          %p450 = scmp.lt.s32.totalorder %s22, 1
          %s451 = scalar_select %p450, %s22, 1
          %s452 = smul.addr %s451, 8
          %s453 = scalar_lea.vmem %s4, %s452
        $region60: #{tpu_custom_call.1} parent=55 // pred_fallthru
          _
      $region56: #{tpu_custom_call.1} parent=5 // pred_fallthru
        _
    $region6: #{tpu_custom_call.1} parent=1 // loop_footer
      %s20 = sadd.s32 1, %s16
    $region7: #{tpu_custom_call.1} parent=1 // loop_footer_branch
      %15 = sbr.rel target = $region3
    $region8: #{tpu_custom_call.1} parent=1 // loop_exit
      _
    %454 = vsyncpa [#allocation3], 1
    %s455 = scalar_lea.sflag [#allocation3], 1
    %456 = vsyncpa %s455, 1
    %457 = vsyncpa [#allocation5], 1
    %s458 = scalar_lea.sflag [#allocation5], 1
    %459 = vsyncpa %s458, 1

</llo_original>
